<compile_context>
chip_gen: v7x
topology: tpu7x:2x2x1
jax: 0.10.0
libtpu: 0.0.40
codegen_flags: <defaults>
</compile_context>

<pallas_src>
import functools

import jax
import jax.numpy as jnp
from jax.experimental import pallas as pl
from jax.experimental.pallas import tpu as pltpu


def _mono_acc_kernel(logits_ref, labels_ref, count_ref, *, n_r):
    """Grid step (rj, d): one (1, C, tile_r) logits slab + (1, 1, tile_r) labels."""
    rj = pl.program_id(0)   # R-tile index ("parallel"; owns count_ref block rj)
    d = pl.program_id(1)    # leading-dim index ("arbitrary"; reduction axis)

    @pl.when(d == 0)
    def _():
        count_ref[...] = jnp.zeros_like(count_ref)

    logits = logits_ref[0]            # (C, tile_r), native dtype
    labels = labels_ref[0]            # (1, tile_r), int32
    c, tile_r = logits.shape

    # First-occurrence argmax over the class (sublane) axis — matches torch.max
    # tie-breaking (lowest index among maxima).
    maxval = jnp.max(logits, axis=0, keepdims=True)               # (1, tile_r)
    cls = jax.lax.broadcasted_iota(jnp.int32, (c, tile_r), 0)     # (C, tile_r)
    cand = jnp.where(logits == maxval, cls, jnp.int32(c))         # non-max -> C
    pred = jnp.min(cand, axis=0, keepdims=True)                   # (1, tile_r)

    # Mask lanes beyond the true trailing extent: the last R-tile may be partial
    # and its out-of-range columns contain whatever data Pallas brought in.
    col = rj * tile_r + jax.lax.broadcasted_iota(jnp.int32, (1, tile_r), 1)
    valid = col < n_r
    correct = (valid & (pred == labels)).astype(jnp.int32)        # (1, tile_r)

    # int32 partial count for this R-tile, accumulated across the D0 axis.
    count_ref[0] = count_ref[0] + jnp.sum(correct, axis=1, keepdims=True)


def _select_tile_r(c, r, itemsize):
    """Largest lane tile whose double-buffered logits block fits a conservative
    cross-generation VMEM budget (headroom under v5e's 16 MiB scoped default,
    and well under v7x's 64 MiB physical / 32 MiB scoped)."""
    budget_bytes = 6 * 1024 * 1024                  # 2 x (C * tile_r * itemsize)
    max_by_vmem = budget_bytes // (2 * c * itemsize)
    tile = min(4096, max_by_vmem)
    tile = max(128, (tile // 128) * 128)            # lane multiple, floor of 128
    if r <= tile:
        return r                                    # full trailing dim is always legal
    return tile


def lab_mono_accuracy(output, target, *, tile_r=None):
    """Pallas implementation of LabMonoAccuracy.forward. Returns a 0-d f32 array."""
    out_mono = jnp.asarray(output["out_mono"])                 # keep native dtype
    lab_mono = jnp.asarray(target["lab_mono"]).astype(jnp.int32)

    if out_mono.ndim < 2:
        raise ValueError("out_mono must have a class dimension at axis 1")

    d0 = out_mono.shape[0]
    c = out_mono.shape[1]
    r = 1
    for s in out_mono.shape[2:]:
        r *= s

    # Native-layout view (pure reshape, no transpose, no HBM copy): class dim on
    # sublanes, flattened trailing dims on lanes.  Row-major flattening of the
    # (D0, R) prediction grid reproduces `out_mono.max(dim=1)[1].view(-1)` order.
    # TODO(synk): 2-D (N, C) inputs take the R=1 lane-sparse fallback here; a
    # lane-axis argmax variant would be faster for that layout.
    logits = out_mono.reshape(d0, c, r)
    n_total = d0 * r
    assert lab_mono.size == n_total, "pred/label length mismatch"
    labels = lab_mono.reshape(d0, 1, r)

    if tile_r is None:
        tile_r = _select_tile_r(c, r, logits.dtype.itemsize)
    assert tile_r == r or tile_r % 128 == 0, "tile_r must be full R or a lane multiple"
    n_r_tiles = pl.cdiv(r, tile_r)

    kernel = functools.partial(_mono_acc_kernel, n_r=r)

    counts = pl.pallas_call(
        kernel,
        out_shape=jax.ShapeDtypeStruct((n_r_tiles, 1, 1), jnp.int32),
        grid_spec=pltpu.PrefetchScalarGridSpec(
            num_scalar_prefetch=0,
            grid=(n_r_tiles, d0),
            in_specs=[
                pl.BlockSpec((1, c, tile_r), lambda rj, d: (d, 0, rj)),
                pl.BlockSpec((1, 1, tile_r), lambda rj, d: (d, 0, rj)),
            ],
            out_specs=pl.BlockSpec((1, 1, 1), lambda rj, d: (rj, 0, 0)),
        ),
        compiler_params=pltpu.CompilerParams(
            dimension_semantics=("parallel", "arbitrary")),
    )(logits, labels)

    # Finalize outside the kernel: int32 per-tile partials -> mean accuracy.
    return jnp.sum(counts).astype(jnp.float32) / jnp.float32(n_total)


def _reference_accuracy(out_mono, lab_mono):
    pred = jnp.argmax(out_mono, axis=1).reshape(-1)
    lab = lab_mono.reshape(-1)
    return jnp.mean((pred == lab).astype(jnp.float32))


if __name__ == "__main__":
    key = jax.random.PRNGKey(0)
    k1, k2, k3, k4 = jax.random.split(key, 4)

    # Check 1: small (B, C, T) shape consistent with the module; single lane tile.
    B, C, T = 2, 16, 16
    out_mono = jax.random.normal(k1, (B, C, T), dtype=jnp.float32)
    lab_mono = jax.random.randint(k2, (B, T), 0, C, dtype=jnp.int32)
    acc = lab_mono_accuracy({"out_mono": out_mono}, {"lab_mono": lab_mono})
    jax.block_until_ready(acc)
    ref = _reference_accuracy(out_mono, lab_mono)
    assert abs(float(acc) - float(ref)) < 1e-6, (float(acc), float(ref))
    accuracy_value = float(acc)       # matches forward()'s `.item()` -> python float

    # Check 2: multi-tile grid with a masked partial last lane tile (T=200, tile_r=128).
    B2, C2, T2 = 2, 16, 200
    out2 = jax.random.normal(k3, (B2, C2, T2), dtype=jnp.float32)
    lab2 = jax.random.randint(k4, (B2, T2), 0, C2, dtype=jnp.int32)
    acc2 = lab_mono_accuracy({"out_mono": out2}, {"lab_mono": lab2}, tile_r=128)
    jax.block_until_ready(acc2)
    ref2 = _reference_accuracy(out2, lab2)
    assert abs(float(acc2) - float(ref2)) < 1e-6, (float(acc2), float(ref2))

    # Check 3: bf16 logits (kernel performs no forced f32 cast).
    out3 = out2.astype(jnp.bfloat16)
    acc3 = lab_mono_accuracy({"out_mono": out3}, {"lab_mono": lab2})
    jax.block_until_ready(acc3)
    ref3 = _reference_accuracy(out3, lab2)
    assert abs(float(acc3) - float(ref3)) < 1e-6, (float(acc3), float(ref3))

    print("KERNEL_OK")
</pallas_src>

<mosaic_0001>
module attributes {stable_mosaic.version = 11 : i64} {
  func.func @_mono_acc_kernel(%arg0: i32, %arg1: i32, %arg2: memref<1x16x16xf32, #tpu.memory_space<vmem>>, %arg3: memref<1x1x16xi32, #tpu.memory_space<vmem>>, %arg4: memref<1x1x1xi32, #tpu.memory_space<vmem>>) attributes {dimension_semantics = [#tpu.dimension_semantics<parallel>, #tpu.dimension_semantics<arbitrary>], iteration_bounds = array<i64: 1, 2>, scalar_prefetch = 0 : i64, scratch_operands = 0 : i64, tpu.core_type = #tpu.core_type<tc>, window_params = [{transform_indices = @transform_0, window_bounds = array<i64: 1, 16, 16>}, {transform_indices = @transform_1, window_bounds = array<i64: 1, 1, 16>}, {transform_indices = @transform_2, window_bounds = array<i64: 1, 1, 1>}]} {
    %c0_i32 = arith.constant 0 : i32
    %0 = arith.cmpi eq, %arg1, %c0_i32 : i32
    %1 = arith.extui %0 : i1 to i32
    %c0_i32_0 = arith.constant 0 : i32
    %2 = arith.cmpi ne, %1, %c0_i32_0 : i32
    scf.if %2 {
      %c0_i32_16 = arith.constant 0 : i32
      %33 = vector.broadcast %c0_i32_16 : i32 to vector<1x1x1xi32>
      %c0_17 = arith.constant 0 : index
      %c0_18 = arith.constant 0 : index
      %c0_19 = arith.constant 0 : index
      %34 = vector.load %arg4[%c0_17, %c0_18, %c0_19] : memref<1x1x1xi32, #tpu.memory_space<vmem>>, vector<1x1x1xi32>
      tpu.vector_store %arg4[%c0_17, %c0_18, %c0_19], %33 {strides = array<i32>} : memref<1x1x1xi32, #tpu.memory_space<vmem>>, vector<1x1x1xi32>,
    } else {
    }
    %c0 = arith.constant 0 : index
    %c0_1 = arith.constant 0 : index
    %c0_2 = arith.constant 0 : index
    %3 = vector.load %arg2[%c0, %c0_1, %c0_2] : memref<1x16x16xf32, #tpu.memory_space<vmem>>, vector<1x16x16xf32>
    %4 = vector.shape_cast %3 : vector<1x16x16xf32> to vector<16x16xf32>
    %c0_3 = arith.constant 0 : index
    %c0_4 = arith.constant 0 : index
    %c0_5 = arith.constant 0 : index
    %5 = vector.load %arg3[%c0_3, %c0_4, %c0_5] : memref<1x1x16xi32, #tpu.memory_space<vmem>>, vector<1x1x16xi32>
    %6 = vector.shape_cast %5 : vector<1x1x16xi32> to vector<1x16xi32>
    %cst = arith.constant dense<0xFF800000> : vector<16xf32>
    %7 = vector.multi_reduction <maximumf>, %4, %cst [0] : vector<16x16xf32> to vector<16xf32>
    %8 = vector.shape_cast %7 : vector<16xf32> to vector<1x16xf32>
    %9 = tpu.iota {dimensions = array<i32: 0>} : vector<16x16xi32>
    %10 = vector.broadcast %8 : vector<1x16xf32> to vector<16x16xf32>
    %11 = arith.cmpf oeq, %4, %10 : vector<16x16xf32>
    %c16_i32 = arith.constant 16 : i32
    %12 = vector.broadcast %c16_i32 : i32 to vector<16x16xi32>
    %13 = arith.select %11, %9, %12 : vector<16x16xi1>, vector<16x16xi32>
    %cst_6 = arith.constant dense<2147483647> : vector<16xi32>
    %14 = vector.multi_reduction <minsi>, %13, %cst_6 [0] : vector<16x16xi32> to vector<16xi32>
    %15 = vector.shape_cast %14 : vector<16xi32> to vector<1x16xi32>
    %c16_i32_7 = arith.constant 16 : i32
    %16 = arith.muli %arg0, %c16_i32_7 : i32
    %17 = tpu.iota {dimensions = array<i32: 1>} : vector<1x16xi32>
    %18 = vector.broadcast %16 : i32 to vector<1x16xi32>
    %19 = arith.addi %18, %17 : vector<1x16xi32>
    %c16_i32_8 = arith.constant 16 : i32
    %20 = vector.broadcast %c16_i32_8 : i32 to vector<1x16xi32>
    %21 = arith.cmpi slt, %19, %20 : vector<1x16xi32>
    %22 = arith.cmpi eq, %15, %6 : vector<1x16xi32>
    %23 = arith.andi %21, %22 : vector<1x16xi1>
    %24 = arith.extui %23 : vector<1x16xi1> to vector<1x16xi32>
    %c0_9 = arith.constant 0 : index
    %c0_10 = arith.constant 0 : index
    %c0_11 = arith.constant 0 : index
    %25 = vector.load %arg4[%c0_9, %c0_10, %c0_11] : memref<1x1x1xi32, #tpu.memory_space<vmem>>, vector<1x1x1xi32>
    %26 = vector.shape_cast %25 : vector<1x1x1xi32> to vector<1x1xi32>
    %cst_12 = arith.constant dense<0> : vector<1xi32>
    %27 = vector.multi_reduction <add>, %24, %cst_12 [1] : vector<1x16xi32> to vector<1xi32>
    %28 = vector.shape_cast %27 : vector<1xi32> to vector<1x1xi32>
    %29 = arith.addi %26, %28 : vector<1x1xi32>
    %c0_13 = arith.constant 0 : index
    %c0_14 = arith.constant 0 : index
    %c0_15 = arith.constant 0 : index
    %30 = vector.load %arg4[%c0_13, %c0_14, %c0_15] : memref<1x1x1xi32, #tpu.memory_space<vmem>>, vector<1x1x1xi32>
    %31 = vector.shape_cast %30 : vector<1x1x1xi32> to vector<1x1xi32>
    %32 = vector.shape_cast %29 : vector<1x1xi32> to vector<1x1x1xi32>
    tpu.vector_store %arg4[%c0_13, %c0_14, %c0_15], %32 {strides = array<i32>} : memref<1x1x1xi32, #tpu.memory_space<vmem>>, vector<1x1x1xi32>,
    return
  }
  func.func @transform_0(%arg0: i32, %arg1: i32) -> (i32, i32, i32) {
    %c0_i32 = arith.constant 0 : i32
    %c0_i32_0 = arith.constant 0 : i32
    return %arg1, %c0_i32, %arg0 : i32, i32, i32
  }
  func.func @transform_1(%arg0: i32, %arg1: i32) -> (i32, i32, i32) {
    %c0_i32 = arith.constant 0 : i32
    %c0_i32_0 = arith.constant 0 : i32
    return %arg1, %c0_i32, %arg0 : i32, i32, i32
  }
  func.func @transform_2(%arg0: i32, %arg1: i32) -> (i32, i32, i32) {
    %c0_i32 = arith.constant 0 : i32
    %c0_i32_0 = arith.constant 0 : i32
    %c0_i32_1 = arith.constant 0 : i32
    return %arg0, %c0_i32, %c0_i32_0 : i32, i32, i32
  }
}

</mosaic_0001>

<llo_original>
// kernel: tpu_custom_call.1
$region0: #{tpu_custom_call.1}
  #allocation0 [shape = 'u32[]', space=smem, size = 0x4, offset = 0x4, fixed_abs, tag = 'smem constant byte address 0x4 - core index']
  #allocation1 [shape = 'u32[144,128]{1,0:T(1,128)}', space=vmem, size = 0x12000, scoped, tag = 'internal scratch']
  %s0 = inlined_call_operand.hbm [shape: f32[2,16,16], index: 0, kind: input, shape index: {}]
  %s1 = inlined_call_operand.vmem [shape: s32[2,1,16], index: 1, kind: input, shape index: {}]
  %s2 = inlined_call_operand.hbm [shape: s32[1,1,1], index: 2, kind: output, shape index: {}]
  %s3 = sld [smem:[#allocation0]]
  $region49: #{tpu_custom_call.1} parent=0
    _
  %s5 = ssub.s32 1, %s3
  %s6 = scalar_select 0, %s5, %s3
  $region1: #{tpu_custom_call.1} parent=0
    #allocation2 [shape = 'u8[16384]{0}', space=vmem, size = 0x4000, scoped, tag = 'input window, operand 0']
    #allocation3 [shape = 's32[2]{0}', space=sflag, size = 0x8, scoped, tag = 'scoped memory for tpu_custom_call.1']
    #allocation4 [shape = 's32[2]{0}', space=sflag, size = 0x8, scoped, tag = 'scoped memory for tpu_custom_call.1']
    #allocation5 [shape = 'u8[512]{0}', space=vmem, size = 0x400, scoped, tag = 'output window, operand 0, single buffered']
    %7 = vsyncpa [#allocation3], 0
    %s8 = scalar_lea.sflag [#allocation3], 1
    %9 = vsyncpa %s8, 0
    %10 = vsyncpa [#allocation4], 0
    loop: start=0, step=1, limit=4
    $region2: #{tpu_custom_call.1} parent=1 // loop_pre_header
      _
    $region3: #{tpu_custom_call.1} parent=1 // loop_header
      %s12 = sphi 0, %s16
      %p13 = scmp.ge.s32.totalorder %s12, 4
      %s19 = sphi 0, %s31
      %s20 = sphi 0, %s27
      %s21 = sphi 0, %s19
      %s22 = sphi 0, %s20
      %s23 = sphi 0, %s21
      %s24 = sphi 0, %s22
      %s36 = sphi 0, %s38
      %s39 = sphi 0, %s36
      %s40 = sphi 0, %s39
      %s56 = sphi 0, %s40
      %s64 = sphi 0, %s66
      %s67 = sphi 0, %s64
      %s68 = sphi 0, %s67
      %s84 = sphi 0, %s68
      %s90 = sphi 0, %s92
      %s93 = sphi 0, %s90
      %s94 = sphi 0, %s93
      %s110 = sphi 0, %s94
    $region4: #{tpu_custom_call.1} parent=1 // loop_header_branch
      %15 = sbr.rel (%p13) target = $region8
    $region5: #{tpu_custom_call.1} parent=1 // loop_body
      %s17 = ssub.s32 %s12, 1
      %s18 = ssub.s32 %s12, 2
      %s25 = sadd.s32 1, %s20
      %p26 = scmp.ge.s32.totalorder %s25, 2
      %s27 = scalar_select %p26, 0, %s25
      %s28 = sadd.s32 1, %s19
      %s29 = scalar_select %p26, %s28, %s19
      %p30 = scmp.ge.s32.totalorder %s29, 1
      %s31 = scalar_select %p30, 0, %s29
      %s32 = ssub.s32 %s20, %s27
      %s33 = ssub.s32 %s19, %s31
      %s34 = sor.u32 %s32, %s33
      %p35 = scmp.eq.s32.totalorder %s34, 0
      %s37 = sadd.s32 %s36, 1
      %s38 = scalar_select %p35, %s36, %s37
      %p41 = pneg %p35
      %p42 = scmp.eq.s32.totalorder %s12, 1
      %p43 = por %p41, %p42
      %p44 = scmp.ne.s32.totalorder %s36, %s39
      %p45 = scmp.eq.s32.totalorder %s12, 0
      %p46 = por %p44, %p45
      %p47 = scmp.ne.s32.totalorder %s36, %s39
      %p48 = scmp.eq.s32.totalorder %s17, 1
      %p49 = por %p47, %p48
      %p50 = scmp.ne.s32.totalorder %s39, %s40
      %p51 = scmp.eq.s32.totalorder %s17, 0
      %p52 = por %p50, %p51
      %p53 = scmp.ne.s32.totalorder %s39, %s40
      %p54 = scmp.eq.s32.totalorder %s18, 1
      %p55 = por %p53, %p54
      %p57 = scmp.ne.s32.totalorder %s40, %s56
      %p58 = scmp.eq.s32.totalorder %s18, 0
      %p59 = por %p57, %p58
      %s60 = ssub.s32 %s20, %s27
      %s61 = ssub.s32 %s19, %s31
      %s62 = sor.u32 %s60, %s61
      %p63 = scmp.eq.s32.totalorder %s62, 0
      %s65 = sadd.s32 %s64, 1
      %s66 = scalar_select %p63, %s64, %s65
      %p69 = pneg %p63
      %p70 = scmp.eq.s32.totalorder %s12, 1
      %p71 = por %p69, %p70
      %p72 = scmp.ne.s32.totalorder %s64, %s67
      %p73 = scmp.eq.s32.totalorder %s12, 0
      %p74 = por %p72, %p73
      %p75 = scmp.ne.s32.totalorder %s64, %s67
      %p76 = scmp.eq.s32.totalorder %s17, 1
      %p77 = por %p75, %p76
      %p78 = scmp.ne.s32.totalorder %s67, %s68
      %p79 = scmp.eq.s32.totalorder %s17, 0
      %p80 = por %p78, %p79
      %p81 = scmp.ne.s32.totalorder %s67, %s68
      %p82 = scmp.eq.s32.totalorder %s18, 1
      %p83 = por %p81, %p82
      %p85 = scmp.ne.s32.totalorder %s68, %s84
      %p86 = scmp.eq.s32.totalorder %s18, 0
      %p87 = por %p85, %p86
      %s88 = ssub.s32 %s19, %s31
      %p89 = scmp.eq.s32.totalorder %s88, 0
      %s91 = sadd.s32 %s90, 1
      %s92 = scalar_select %p89, %s90, %s91
      %p95 = pneg %p89
      %p96 = scmp.eq.s32.totalorder %s12, 1
      %p97 = por %p95, %p96
      %p98 = scmp.ne.s32.totalorder %s90, %s93
      %p99 = scmp.eq.s32.totalorder %s12, 0
      %p100 = por %p98, %p99
      %p101 = scmp.ne.s32.totalorder %s90, %s93
      %p102 = scmp.eq.s32.totalorder %s17, 1
      %p103 = por %p101, %p102
      %p104 = scmp.ne.s32.totalorder %s93, %s94
      %p105 = scmp.eq.s32.totalorder %s17, 0
      %p106 = por %p104, %p105
      %p107 = scmp.ne.s32.totalorder %s93, %s94
      %p108 = scmp.eq.s32.totalorder %s18, 1
      %p109 = por %p107, %p108
      %p111 = scmp.ne.s32.totalorder %s94, %s110
      %p112 = scmp.eq.s32.totalorder %s18, 0
      %p113 = por %p111, %p112
      %p114 = scmp.le.s32.totalorder 1, %s12
      %p115 = scmp.lt.s32.totalorder %s12, 3
      %p116 = pnand %p114, %p115
      %p117 = pneg %p116
      // Predicated region
      $region9: #{tpu_custom_call.1} parent=5 // pred_check
        _
      $region10: #{tpu_custom_call.1} parent=5 // pred_check_branch
        %119 = sbr.rel (%p116) target = $region12
      $region11: #{tpu_custom_call.1} parent=5 // pred_region
        %s120 = ssub.s32 %s12, 1
      $region12: #{tpu_custom_call.1} parent=5 // pred_fallthru
        _
      %p121 = scmp.lt.s32.totalorder %s12, 2
      // Predicated region
      $region13: #{tpu_custom_call.1} parent=5 // pred_check
        %p122 = pneg %p121
      $region14: #{tpu_custom_call.1} parent=5 // pred_check_branch
        %124 = sbr.rel (%p122) target = $region16
      $region15: #{tpu_custom_call.1} parent=5 // pred_region
        // Predicated region
        $region17: #{tpu_custom_call.1} parent=15 // pred_check
          %p125 = pneg %p46
        $region18: #{tpu_custom_call.1} parent=15 // pred_check_branch
          %127 = sbr.rel (%p125) target = $region20
        $region19: #{tpu_custom_call.1} parent=15 // pred_region
          %s128 = sand.u32 %s36, 1
          %s129 = scalar_lea.sflag [#allocation3], %s128
          %s130 = sand.u32 %s36, 1
          %s131 = smul.addr %s130, 16
          %s132 = scalar_lea.vmem [#allocation2], %s131
          %s134 = ssub.s32 256, 256
          %135 = vsyncadd %s129, %s134
          %s136 = smul.addr %s20, 2
          %s137 = sadd.s32 %s19, %s136
          %s138 = smul.addr %s137, 128
          %s139 = scalar_lea.hbm %s0, %s138
          %s140 = sshll.u32 %s132, 4
          %s141 = int_to_ptr.vmem [resolvable:$true] %s140
          %146 = dma.hbm_to_vmem [thread:$0]  %s139, 256, %s141, %s129, 128, 128, 8
        $region20: #{tpu_custom_call.1} parent=15 // pred_fallthru
          _
        // Predicated region
        $region21: #{tpu_custom_call.1} parent=15 // pred_check
          %p147 = pneg %p74
        $region22: #{tpu_custom_call.1} parent=15 // pred_check_branch
          %149 = sbr.rel (%p147) target = $region24
        $region23: #{tpu_custom_call.1} parent=15 // pred_region
          %p150 = scmp.lt.s32.totalorder %s20, 1
          %s151 = scalar_select %p150, %s20, 1
          %p152 = scmp.lt.s32.totalorder %s19, 0
          %s153 = scalar_select %p152, %s19, 0
          %s154 = sadd.s32 %s153, %s151
          %s155 = scalar_lea.vmem %s1, %s154
        $region24: #{tpu_custom_call.1} parent=15 // pred_fallthru
          _
      $region16: #{tpu_custom_call.1} parent=5 // pred_fallthru
        _
      %p156 = scmp.le.s32.totalorder 1, %s12
      %p157 = scmp.lt.s32.totalorder %s12, 3
      %p158 = pnand %p156, %p157
      %p159 = pneg %p158
      // Predicated region
      $region25: #{tpu_custom_call.1} parent=5 // pred_check
        _
      $region26: #{tpu_custom_call.1} parent=5 // pred_check_branch
        %161 = sbr.rel (%p158) target = $region28
      $region27: #{tpu_custom_call.1} parent=5 // pred_region
        %s162 = ssub.s32 %s12, 1
        %s163 = sand.u32 %s39, 1
        %s164 = scalar_lea.sflag [#allocation3], %s163
        %s165 = sand.u32 %s39, 1
        %s166 = smul.addr %s165, 16
        %s167 = scalar_lea.vmem [#allocation2], %s166
        // Predicated region
        $region29: #{tpu_custom_call.1} parent=27 // pred_check
          %p168 = pneg %p52
        $region30: #{tpu_custom_call.1} parent=27 // pred_check_branch
          %170 = sbr.rel (%p168) target = $region32
        $region31: #{tpu_custom_call.1} parent=27 // pred_region
          %171 = dma.done %s164, 256
        $region32: #{tpu_custom_call.1} parent=27 // pred_fallthru
          _
        %s172 = sand.u32 %s39, 1
        %s173 = scalar_lea.sflag [#allocation3], %s172
        %s174 = sand.u32 %s39, 1
        %s175 = smul.addr %s174, 16
        %s176 = scalar_lea.vmem [#allocation2], %s175
        %p177 = pneg %p52
        %p178 = pneg %p49
        %p179 = scmp.lt.s32.totalorder %s22, 1
        %s180 = scalar_select %p179, %s22, 1
        %p181 = scmp.lt.s32.totalorder %s21, 0
        %s182 = scalar_select %p181, %s21, 0
        %s183 = sadd.s32 %s182, %s180
        %s184 = scalar_lea.vmem %s1, %s183
        %p185 = pneg %p80
        %p186 = pneg %p77
        %p187 = pneg %p106
        %p188 = pneg %p103
        %p189 = scmp.lt.s32.totalorder %s22, 1
        %s190 = scalar_select %p189, %s22, 1
        %p191 = scmp.lt.s32.totalorder %s21, 0
        %s192 = scalar_select %p191, %s21, 0
        %s193 = sadd.s32 %s192, %s190
        %s194 = scalar_lea.vmem %s1, %s193
        %p195 = scmp.eq.s32.totalorder %s22, 0
        // Predicated region
        $region33: #{tpu_custom_call.1} parent=27 // pred_check
          %p196 = pneg %p195
        $region34: #{tpu_custom_call.1} parent=27 // pred_check_branch
          %198 = sbr.rel (%p196) target = $region36
        $region35: #{tpu_custom_call.1} parent=27 // pred_region
          %vm199 = vcmask 0
          %200 = vst.msk [vmem:[#allocation5] sm:$0x1] %vm199, 0
        $region36: #{tpu_custom_call.1} parent=27 // pred_fallthru
          _
        %v201 = vld [vmem:[%s167] sm:$0xff]
        %v202 = vld [vmem:[%s167 + $0x8] sm:$0xff]
        %v203 = vld [vmem:[%s194] sm:$0x1]
        %vm204 = vcmask 130048
        %v205 = vsel %vm204, %v201, -inf
        %v206 = vsel %vm204, %v202, -inf
        %v207 = vmax.f32 %v205, %v206
        %v208 = vrot.slane %v207, 4
        %v209 = vmax.f32 %v207, %v208
        %v210 = vrot.slane %v209, 2
        %v211 = vmax.f32 %v209, %v210
        %v212 = vrot.slane %v211, 1
        %v213 = vmax.f32 %v211, %v212
        %v214 = vlaneseq
        %v215 = vshrl.u32 %v214, 7
        %v216 = vadd.s32 %v215, 8
        %vm217 = vcmp.eq.f32.partialorder %v201, %v213
        %vm218 = vcmp.eq.f32.partialorder %v202, %v213
        %v219 = vsel %vm217, %v215, 16
        %v220 = vsel %vm218, %v216, 16
        %v221 = vsel %vm204, %v219, 2147483647
        %v222 = vsel %vm204, %v220, 2147483647
        %vm223 = vcmp.lt.s32.totalorder %v221, %v222
        %v224 = vsel %vm223, %v221, %v222
        %v225 = vrot.slane %v224, 4
        %vm226 = vcmp.lt.s32.totalorder %v224, %v225
        %v227 = vsel %vm226, %v224, %v225
        %v228 = vrot.slane %v227, 2
        %vm229 = vcmp.lt.s32.totalorder %v227, %v228
        %v230 = vsel %vm229, %v227, %v228
        %v231 = vrot.slane %v230, 1
        %vm232 = vcmp.lt.s32.totalorder %v230, %v231
        %v233 = vsel %vm232, %v230, %v231
        %s234 = smul.u32 %s21, 16
        %v235 = vlaneseq
        %v236 = vand.u32 %v235, 127
        %v237 = vstv %s234
        %v238 = vadd.s32 %v237, %v236
        %vm239 = vcmp.lt.s32.totalorder %v238, 16
        %vm240 = vcmp.eq.s32.totalorder %v233, %v203
        %vm241 = vmand %vm239, %vm240
        %v242 = vsel %vm241, 1, 0
        %v243 = vld [vmem:[#allocation5] sm:$0x1]
        %vm244 = vcmask 122880
        %v245 = vsel %vm244, %v242, 0
        %v246 = vand.u32 %v245, 65535
        %v247 = vshrl.u32 %v245, 16
        %v248 = vcvt.s32.f32 %v246
        %v249 = vcvt.s32.f32 %v247
        %250 = vadd.xlane.f32.xlu0 %v248
        %v251 = vpop.xlane.xlu0 %250
        %252 = vadd.xlane.f32.xlu0 %v249
        %v253 = vpop.xlane.xlu0 %252
        %v254 = vcvt.f32.s32 %v251
        %v255 = vcvt.f32.s32 %v253
        %v256 = vshll.u32 %v255, 16
        %v257 = vadd.s32 %v256, %v254
        %v258 = vadd.s32 %v243, %v257
        %vm259 = vcmask 0
        %260 = vst.msk [vmem:[#allocation5] sm:$0x1] %vm259, %v258
        // Predicated region
        $region37: #{tpu_custom_call.1} parent=27 // pred_check
          %p261 = pneg %p103
        $region38: #{tpu_custom_call.1} parent=27 // pred_check_branch
          %263 = sbr.rel (%p261) target = $region40
        $region39: #{tpu_custom_call.1} parent=27 // pred_region
          %s265 = ssub.s32 16, 16
          %266 = vsyncadd [#allocation4], %s265
          %s267 = smul.addr %s21, 16
          %s268 = scalar_lea.hbm %s2, %s267
          %s270 = sshll.u32 [#allocation5], 4
          %s271 = int_to_ptr.vmem [resolvable:$true] %s270
          %273 = dma.vmem_to_hbm [thread:$0]  %s271, 16, %s268, [#allocation4]
        $region40: #{tpu_custom_call.1} parent=27 // pred_fallthru
          _
        // Predicated region
        $region41: #{tpu_custom_call.1} parent=27 // pred_check
          %p274 = pneg %p103
        $region42: #{tpu_custom_call.1} parent=27 // pred_check_branch
          %276 = sbr.rel (%p274) target = $region44
        $region43: #{tpu_custom_call.1} parent=27 // pred_region
          %277 = dma.done [#allocation4], 16
        $region44: #{tpu_custom_call.1} parent=27 // pred_fallthru
          _
      $region28: #{tpu_custom_call.1} parent=5 // pred_fallthru
        _
      %p278 = scmp.le.s32.totalorder 2, %s12
      // Predicated region
      $region45: #{tpu_custom_call.1} parent=5 // pred_check
        %p279 = pneg %p278
      $region46: #{tpu_custom_call.1} parent=5 // pred_check_branch
        %281 = sbr.rel (%p279) target = $region48
      $region47: #{tpu_custom_call.1} parent=5 // pred_region
        %s282 = ssub.s32 %s12, 2
      $region48: #{tpu_custom_call.1} parent=5 // pred_fallthru
        _
    $region6: #{tpu_custom_call.1} parent=1 // loop_footer
      %s16 = sadd.s32 1, %s12
    $region7: #{tpu_custom_call.1} parent=1 // loop_footer_branch
      %11 = sbr.rel target = $region3
    $region8: #{tpu_custom_call.1} parent=1 // loop_exit
      _
    %283 = vsyncpa [#allocation3], 1
    %s284 = scalar_lea.sflag [#allocation3], 1
    %285 = vsyncpa %s284, 1
    %286 = vsyncpa [#allocation4], 1
    %s287 = scalar_lea.sflag [#allocation4], 1
    %288 = vsyncpa %s287, 1

</llo_original>
